<compile_context>
chip_gen: v5e
topology: v5e:2x2
jax: 0.10.0
libtpu: 0.0.40
codegen_flags: <defaults>
</compile_context>

<pallas_src>
import jax
import jax.numpy as jnp
from jax.experimental import pallas as pl
from jax.experimental.pallas import tpu as pltpu


def upsampler_kernel(x_ref, awt_ref, b_ref, o_ref):
    # x_ref  : (1, Cin, H, W)        input image block, native dtype
    # awt_ref: (W, TWo)       bf16   A_w^T tile (W-interpolation matrix)
    # b_ref  : (TCo*Ho, Cin*H) bf16  kron(conv-weight tile, A_h)
    # o_ref  : (1, TCo*Ho, TWo)      output tile (wrapper reshapes to NCHW for free)
    _, cin, h, w = x_ref.shape
    x2d = x_ref[0].reshape(cin * h, w)            # leading-dim merge: free view

    # W-direction interpolation (small matmul), f32 accumulation.
    a = jnp.dot(x2d, awt_ref[...], preferred_element_type=jnp.float32)

    # H-direction interpolation fused with the 1x1 conv:
    # (TCo*Ho, Cin*H) @ (Cin*H, TWo) on the MXU, bf16 x bf16, f32 accumulate.
    out2d = jnp.dot(b_ref[...], a.astype(jnp.bfloat16),
                    preferred_element_type=jnp.float32)
    o_ref[0] = out2d.astype(o_ref.dtype)


def _interp_matrix(out_size, in_size):
    """Row-stochastic bilinear matrix A (out_size, in_size), align_corners=True."""
    if out_size == 1:
        src = jnp.zeros((1,), jnp.float32)
    else:
        src = jnp.arange(out_size, dtype=jnp.float32) * (
            (in_size - 1) / (out_size - 1))
    lo = jnp.clip(jnp.floor(src), 0, in_size - 1).astype(jnp.int32)
    hi = jnp.minimum(lo + 1, in_size - 1)
    w_hi = src - lo.astype(jnp.float32)
    w_lo = 1.0 - w_hi
    rows = jnp.arange(out_size)
    a = jnp.zeros((out_size, in_size), jnp.float32)
    a = a.at[rows, lo].add(w_lo)
    a = a.at[rows, hi].add(w_hi)
    return a


def _vmem_capacity_bytes():
    """Physical VMEM per TensorCore; conservative fallback if the query fails."""
    try:
        cap = getattr(pltpu.get_tpu_info(), "vmem_capacity_bytes", None)
        if cap:
            return int(cap)
    except Exception:
        pass
    return 64 << 20   # v7x per-core VMEM (smallest of v5e/v6e/v7x)


def _pick_wo_tile(wo):
    """Full Wo if small; otherwise a lane-dense multiple-of-128 chunk."""
    if wo <= 512 or wo % 128 != 0:
        return wo
    for t in (512, 384, 256, 128):
        if wo % t == 0:
            return t
    return wo


def _pick_cout_tile(cout, ho, cin, h, w, t_wo, x_itemsize, out_itemsize, budget):
    """Largest divisor of Cout whose double-buffered working set fits `budget`."""
    def working_set(t):
        return (2 * t * ho * cin * h * 2            # B tile (bf16), double-buffered
                + 2 * cin * h * w * x_itemsize      # x block
                + 2 * w * t_wo * 2                  # A_w^T tile (bf16)
                + 2 * t * ho * t_wo * out_itemsize) # output block
    for t in range(cout, 0, -1):
        if cout % t != 0:
            continue
        if t != cout and (t * ho) % 8 != 0:         # keep the (8,128) block rule
            continue
        if working_set(t) <= budget:
            return t, working_set(t)
    return 1, working_set(1)


def upsampler(x_nchw, weight_oihw, size_h_w, *, cout_tile=None, wo_tile=None):
    """x: (N, Cin, H, W); weight: (Cout, Cin, 1, 1); size_h_w: (Ho, Wo)
    -> (N, Cout, Ho, Wo)"""
    N, Cin, H, W = x_nchw.shape
    Cout = weight_oihw.shape[0]
    Ho, Wo = size_h_w

    w_mat = weight_oihw.reshape(Cout, Cin).astype(jnp.float32)     # 1x1 conv weight
    a_h = _interp_matrix(Ho, H)                                    # (Ho, H)
    a_w_t = _interp_matrix(Wo, W).T.astype(jnp.bfloat16)           # (W, Wo) bf16
    b_mat = jnp.kron(w_mat, a_h).astype(jnp.bfloat16)              # (Cout*Ho, Cin*H)

    x_itemsize = x_nchw.dtype.itemsize
    out_dtype = x_nchw.dtype
    out_itemsize = jnp.dtype(out_dtype).itemsize

    vmem_cap = _vmem_capacity_bytes()
    budget = int(0.55 * vmem_cap)                 # leaves headroom on every gen
    t_wo = wo_tile or _pick_wo_tile(Wo)
    if cout_tile is not None:
        t_co = cout_tile
        _, working_set = _pick_cout_tile(t_co, Ho, Cin, H, W, t_wo,
                                         x_itemsize, out_itemsize, budget)
    else:
        t_co, working_set = _pick_cout_tile(Cout, Ho, Cin, H, W, t_wo,
                                            x_itemsize, out_itemsize, budget)
    vmem_limit = min(int(0.85 * vmem_cap), max(32 << 20, working_set + (8 << 20)))

    n_c, n_w = Cout // t_co, Wo // t_wo
    grid = (n_c, N, n_w)   # c outer -> each B tile fetched once; n / Wo innermost

    flops = 2 * N * (Cin * H * W * Wo + (Cout * Ho) * (Cin * H) * Wo)
    bytes_accessed = int(x_nchw.size * x_itemsize + b_mat.size * 2
                         + a_w_t.size * 2 + N * Cout * Ho * Wo * out_itemsize)

    out_flat = pl.pallas_call(
        upsampler_kernel,
        out_shape=jax.ShapeDtypeStruct((N, Cout * Ho, Wo), out_dtype),
        grid_spec=pltpu.PrefetchScalarGridSpec(
            num_scalar_prefetch=0,
            grid=grid,
            in_specs=[
                # x: constant over the c and Wo axes -> fetched once per image.
                pl.BlockSpec((1, Cin, H, W), lambda ci, ni, wi: (ni, 0, 0, 0)),
                pl.BlockSpec((W, t_wo), lambda ci, ni, wi: (0, wi)),
                # B: constant over the inner axes -> each tile DMA'd exactly once.
                pl.BlockSpec((t_co * Ho, Cin * H), lambda ci, ni, wi: (ci, 0)),
            ],
            out_specs=pl.BlockSpec((1, t_co * Ho, t_wo),
                                   lambda ci, ni, wi: (ni, ci, wi)),
        ),
        compiler_params=pltpu.CompilerParams(
            # No cross-step scratch dependence -> all axes parallel (v7x 2-TC, megacore).
            dimension_semantics=("parallel", "parallel", "parallel"),
            vmem_limit_bytes=vmem_limit),
        cost_estimate=pl.CostEstimate(flops=flops, transcendentals=0,
                                      bytes_accessed=bytes_accessed),
    )(x_nchw, a_w_t, b_mat)

    # (N, Cout*Ho, Wo) -> (N, Cout, Ho, Wo): contiguous, free reshape.
    return out_flat.reshape(N, Cout, Ho, Wo)


if __name__ == "__main__":
    # Small deterministic shapes: batch=2, in_feat=4, out_feat=8, 16x16 -> 32x32
    N, Cin, Cout, H, W = 2, 4, 8, 16, 16
    Ho, Wo = 32, 32

    key = jax.random.PRNGKey(0)
    kx, kw = jax.random.split(key)
    x = jax.random.normal(kx, (N, Cin, H, W), dtype=jnp.float32)
    weight = jax.random.normal(kw, (Cout, Cin, 1, 1), dtype=jnp.float32) * 0.1

    out = upsampler(x, weight, (Ho, Wo))
    jax.block_until_ready(out)

    # Independent pure-JAX reference: gather-based bilinear (align_corners=True) + 1x1 conv.
    def bilinear_ref(xx, ho, wo):
        _, _, hh, ww = xx.shape
        ys = jnp.arange(ho, dtype=jnp.float32) * ((hh - 1) / (ho - 1)) if ho > 1 \
            else jnp.zeros((1,), jnp.float32)
        xs = jnp.arange(wo, dtype=jnp.float32) * ((ww - 1) / (wo - 1)) if wo > 1 \
            else jnp.zeros((1,), jnp.float32)
        y0 = jnp.floor(ys).astype(jnp.int32)
        y1 = jnp.minimum(y0 + 1, hh - 1)
        wy = (ys - y0.astype(jnp.float32))[None, None, :, None]
        x0 = jnp.floor(xs).astype(jnp.int32)
        x1 = jnp.minimum(x0 + 1, ww - 1)
        wx = (xs - x0.astype(jnp.float32))[None, None, None, :]
        g = lambda yi, xi: xx[:, :, yi, :][:, :, :, xi]
        return (g(y0, x0) * (1 - wy) * (1 - wx) + g(y0, x1) * (1 - wy) * wx +
                g(y1, x0) * wy * (1 - wx) + g(y1, x1) * wy * wx)

    up_ref = bilinear_ref(x, Ho, Wo)
    ref = jnp.einsum('oc,nchw->nohw', weight.reshape(Cout, Cin), up_ref)

    assert out.shape == (N, Cout, Ho, Wo)
    # bf16 interpolation/conv weights with f32 accumulation -> looser tolerance.
    assert jnp.allclose(out, ref, atol=2e-2, rtol=2e-2), \
        float(jnp.max(jnp.abs(out - ref)))

    print("KERNEL_OK")
</pallas_src>

<mosaic_0001>
module attributes {stable_mosaic.version = 11 : i64} {
  func.func @upsampler_kernel(%arg0: i32, %arg1: i32, %arg2: i32, %arg3: memref<1x4x16x16xf32, #tpu.memory_space<vmem>>, %arg4: memref<16x32xbf16, #tpu.memory_space<vmem>>, %arg5: memref<256x64xbf16, #tpu.memory_space<vmem>>, %arg6: memref<1x256x32xf32, #tpu.memory_space<vmem>>) attributes {dimension_semantics = [#tpu.dimension_semantics<parallel>, #tpu.dimension_semantics<parallel>, #tpu.dimension_semantics<parallel>], iteration_bounds = array<i64: 1, 2, 1>, scalar_prefetch = 0 : i64, scratch_operands = 0 : i64, tpu.core_type = #tpu.core_type<tc>, window_params = [{transform_indices = @transform_0, window_bounds = array<i64: 1, 4, 16, 16>}, {transform_indices = @transform_1, window_bounds = array<i64: 16, 32>}, {transform_indices = @transform_2, window_bounds = array<i64: 256, 64>}, {transform_indices = @transform_3, window_bounds = array<i64: 1, 256, 32>}]} {
    %c0 = arith.constant 0 : index
    %c0_0 = arith.constant 0 : index
    %c0_1 = arith.constant 0 : index
    %c0_2 = arith.constant 0 : index
    %0 = vector.load %arg3[%c0, %c0_0, %c0_1, %c0_2] : memref<1x4x16x16xf32, #tpu.memory_space<vmem>>, vector<1x4x16x16xf32>
    %1 = vector.shape_cast %0 : vector<1x4x16x16xf32> to vector<4x16x16xf32>
    %2 = vector.shape_cast %1 : vector<4x16x16xf32> to vector<64x16xf32>
    %c0_3 = arith.constant 0 : index
    %c0_4 = arith.constant 0 : index
    %3 = vector.load %arg4[%c0_3, %c0_4] : memref<16x32xbf16, #tpu.memory_space<vmem>>, vector<16x32xbf16>
    %cst = arith.constant dense<0.000000e+00> : vector<64x32xf32>
    %4 = tpu.matmul %2, %3, %cst {dimension_numbers = #tpu.dot_dimension_numbers<[1], [0], [0], [1], [0, 0, 1, 1], [], []>} : vector<64x16xf32>, vector<16x32xbf16>, vector<64x32xf32> -> vector<64x32xf32>
    %c0_5 = arith.constant 0 : index
    %c0_6 = arith.constant 0 : index
    %5 = vector.load %arg5[%c0_5, %c0_6] : memref<256x64xbf16, #tpu.memory_space<vmem>>, vector<256x64xbf16>
    %6 = arith.truncf %4 : vector<64x32xf32> to vector<64x32xbf16>
    %cst_7 = arith.constant dense<0.000000e+00> : vector<256x32xf32>
    %7 = tpu.matmul %5, %6, %cst_7 {dimension_numbers = #tpu.dot_dimension_numbers<[1], [0], [0], [1], [0, 0, 1, 1], [], []>} : vector<256x64xbf16>, vector<64x32xbf16>, vector<256x32xf32> -> vector<256x32xf32>
    %c0_8 = arith.constant 0 : index
    %c0_9 = arith.constant 0 : index
    %c0_10 = arith.constant 0 : index
    %8 = vector.load %arg6[%c0_8, %c0_9, %c0_10] : memref<1x256x32xf32, #tpu.memory_space<vmem>>, vector<1x256x32xf32>
    %9 = vector.shape_cast %8 : vector<1x256x32xf32> to vector<256x32xf32>
    %10 = vector.shape_cast %7 : vector<256x32xf32> to vector<1x256x32xf32>
    tpu.vector_store %arg6[%c0_8, %c0_9, %c0_10], %10 {strides = array<i32>} : memref<1x256x32xf32, #tpu.memory_space<vmem>>, vector<1x256x32xf32>,
    return
  }
  func.func @transform_0(%arg0: i32, %arg1: i32, %arg2: i32) -> (i32, i32, i32, i32) {
    %c0_i32 = arith.constant 0 : i32
    %c0_i32_0 = arith.constant 0 : i32
    %c0_i32_1 = arith.constant 0 : i32
    %c0_i32_2 = arith.constant 0 : i32
    return %arg1, %c0_i32, %c0_i32_0, %c0_i32_1 : i32, i32, i32, i32
  }
  func.func @transform_1(%arg0: i32, %arg1: i32, %arg2: i32) -> (i32, i32) {
    %c0_i32 = arith.constant 0 : i32
    %c0_i32_0 = arith.constant 0 : i32
    return %c0_i32, %arg2 : i32, i32
  }
  func.func @transform_2(%arg0: i32, %arg1: i32, %arg2: i32) -> (i32, i32) {
    %c0_i32 = arith.constant 0 : i32
    %c0_i32_0 = arith.constant 0 : i32
    return %arg0, %c0_i32 : i32, i32
  }
  func.func @transform_3(%arg0: i32, %arg1: i32, %arg2: i32) -> (i32, i32, i32) {
    %c0_i32 = arith.constant 0 : i32
    return %arg1, %arg0, %arg2 : i32, i32, i32
  }
}

</mosaic_0001>

<llo_original>
// kernel: tpu_custom_call.1
$region0: #{tpu_custom_call.1}
  #allocation0 [shape = 'u32[]', space=smem, size = 0x4, offset = 0x4, fixed_abs, tag = 'smem constant byte address 0x4 - core index']
  #allocation1 [shape = 'u32[72,128]{1,0:T(1,128)}', space=vmem, size = 0x9000, scoped, tag = 'internal scratch']
  %s0 = inlined_call_operand.vmem [shape: f32[2,4,16,16], index: 0, kind: input, shape index: {}]
  %s1 = inlined_call_operand.vmem [shape: bf16[16,32], index: 1, kind: input, shape index: {}]
  %s2 = inlined_call_operand.vmem [shape: bf16[256,64], index: 2, kind: input, shape index: {}]
  %s3 = inlined_call_operand.vmem [shape: f32[2,256,32], index: 3, kind: output, shape index: {}]
  %s4 = sld [smem:[#allocation0]]
  $region45: #{tpu_custom_call.1} parent=0
    _
  %s6 = ssub.s32 1, %s4
  %s7 = scalar_select 0, %s6, %s4
  loop: start=0, step=1, limit=4
  $region2: #{tpu_custom_call.1} parent=0 // loop_pre_header
    _
  $region3: #{tpu_custom_call.1} parent=0 // loop_header
    %s9 = sphi 0, %s13
    %p10 = scmp.ge.s32.totalorder %s9, 4
    %s16 = sphi 0, %s35
    %s17 = sphi 0, %s31
    %s18 = sphi 0, %s27
    %s19 = sphi 0, %s16
    %s20 = sphi 0, %s17
    %s21 = sphi 0, %s18
    %s22 = sphi 0, %s19
    %s23 = sphi 0, %s20
    %s24 = sphi 0, %s21
    %s38 = sphi 0, %s40
    %s41 = sphi 0, %s38
    %s42 = sphi 0, %s41
    %s58 = sphi 0, %s42
    %s64 = sphi 0, %s66
    %s67 = sphi 0, %s64
    %s68 = sphi 0, %s67
    %s84 = sphi 0, %s68
    %s90 = sphi 0, %s92
    %s93 = sphi 0, %s90
    %s94 = sphi 0, %s93
    %s110 = sphi 0, %s94
    %s120 = sphi 0, %s122
    %s123 = sphi 0, %s120
    %s124 = sphi 0, %s123
    %s140 = sphi 0, %s124
  $region4: #{tpu_custom_call.1} parent=0 // loop_header_branch
    %12 = sbr.rel (%p10) target = $region8
  $region5: #{tpu_custom_call.1} parent=0 // loop_body
    %s14 = ssub.s32 %s9, 1
    %s15 = ssub.s32 %s9, 2
    %s25 = sadd.s32 1, %s18
    %p26 = scmp.ge.s32.totalorder %s25, 1
    %s27 = scalar_select %p26, 0, %s25
    %s28 = sadd.s32 1, %s17
    %s29 = scalar_select %p26, %s28, %s17
    %p30 = scmp.ge.s32.totalorder %s29, 2
    %s31 = scalar_select %p30, 0, %s29
    %s32 = sadd.s32 1, %s16
    %s33 = scalar_select %p30, %s32, %s16
    %p34 = scmp.ge.s32.totalorder %s33, 1
    %s35 = scalar_select %p34, 0, %s33
    %s36 = ssub.s32 %s17, %s31
    %p37 = scmp.eq.s32.totalorder %s36, 0
    %s39 = sadd.s32 %s38, 1
    %s40 = scalar_select %p37, %s38, %s39
    %p43 = pneg %p37
    %p44 = scmp.eq.s32.totalorder %s9, 1
    %p45 = por %p43, %p44
    %p46 = scmp.ne.s32.totalorder %s38, %s41
    %p47 = scmp.eq.s32.totalorder %s9, 0
    %p48 = por %p46, %p47
    %p49 = scmp.ne.s32.totalorder %s38, %s41
    %p50 = scmp.eq.s32.totalorder %s14, 1
    %p51 = por %p49, %p50
    %p52 = scmp.ne.s32.totalorder %s41, %s42
    %p53 = scmp.eq.s32.totalorder %s14, 0
    %p54 = por %p52, %p53
    %p55 = scmp.ne.s32.totalorder %s41, %s42
    %p56 = scmp.eq.s32.totalorder %s15, 1
    %p57 = por %p55, %p56
    %p59 = scmp.ne.s32.totalorder %s42, %s58
    %p60 = scmp.eq.s32.totalorder %s15, 0
    %p61 = por %p59, %p60
    %s62 = ssub.s32 %s18, %s27
    %p63 = scmp.eq.s32.totalorder %s62, 0
    %s65 = sadd.s32 %s64, 1
    %s66 = scalar_select %p63, %s64, %s65
    %p69 = pneg %p63
    %p70 = scmp.eq.s32.totalorder %s9, 1
    %p71 = por %p69, %p70
    %p72 = scmp.ne.s32.totalorder %s64, %s67
    %p73 = scmp.eq.s32.totalorder %s9, 0
    %p74 = por %p72, %p73
    %p75 = scmp.ne.s32.totalorder %s64, %s67
    %p76 = scmp.eq.s32.totalorder %s14, 1
    %p77 = por %p75, %p76
    %p78 = scmp.ne.s32.totalorder %s67, %s68
    %p79 = scmp.eq.s32.totalorder %s14, 0
    %p80 = por %p78, %p79
    %p81 = scmp.ne.s32.totalorder %s67, %s68
    %p82 = scmp.eq.s32.totalorder %s15, 1
    %p83 = por %p81, %p82
    %p85 = scmp.ne.s32.totalorder %s68, %s84
    %p86 = scmp.eq.s32.totalorder %s15, 0
    %p87 = por %p85, %p86
    %s88 = ssub.s32 %s16, %s35
    %p89 = scmp.eq.s32.totalorder %s88, 0
    %s91 = sadd.s32 %s90, 1
    %s92 = scalar_select %p89, %s90, %s91
    %p95 = pneg %p89
    %p96 = scmp.eq.s32.totalorder %s9, 1
    %p97 = por %p95, %p96
    %p98 = scmp.ne.s32.totalorder %s90, %s93
    %p99 = scmp.eq.s32.totalorder %s9, 0
    %p100 = por %p98, %p99
    %p101 = scmp.ne.s32.totalorder %s90, %s93
    %p102 = scmp.eq.s32.totalorder %s14, 1
    %p103 = por %p101, %p102
    %p104 = scmp.ne.s32.totalorder %s93, %s94
    %p105 = scmp.eq.s32.totalorder %s14, 0
    %p106 = por %p104, %p105
    %p107 = scmp.ne.s32.totalorder %s93, %s94
    %p108 = scmp.eq.s32.totalorder %s15, 1
    %p109 = por %p107, %p108
    %p111 = scmp.ne.s32.totalorder %s94, %s110
    %p112 = scmp.eq.s32.totalorder %s15, 0
    %p113 = por %p111, %p112
    %s114 = ssub.s32 %s17, %s31
    %s115 = ssub.s32 %s16, %s35
    %s116 = sor.u32 %s114, %s115
    %s117 = ssub.s32 %s18, %s27
    %s118 = sor.u32 %s116, %s117
    %p119 = scmp.eq.s32.totalorder %s118, 0
    %s121 = sadd.s32 %s120, 1
    %s122 = scalar_select %p119, %s120, %s121
    %p125 = pneg %p119
    %p126 = scmp.eq.s32.totalorder %s9, 1
    %p127 = por %p125, %p126
    %p128 = scmp.ne.s32.totalorder %s120, %s123
    %p129 = scmp.eq.s32.totalorder %s9, 0
    %p130 = por %p128, %p129
    %p131 = scmp.ne.s32.totalorder %s120, %s123
    %p132 = scmp.eq.s32.totalorder %s14, 1
    %p133 = por %p131, %p132
    %p134 = scmp.ne.s32.totalorder %s123, %s124
    %p135 = scmp.eq.s32.totalorder %s14, 0
    %p136 = por %p134, %p135
    %p137 = scmp.ne.s32.totalorder %s123, %s124
    %p138 = scmp.eq.s32.totalorder %s15, 1
    %p139 = por %p137, %p138
    %p141 = scmp.ne.s32.totalorder %s124, %s140
    %p142 = scmp.eq.s32.totalorder %s15, 0
    %p143 = por %p141, %p142
    %p144 = scmp.le.s32.totalorder 1, %s9
    %p145 = scmp.lt.s32.totalorder %s9, 3
    %p146 = pnand %p144, %p145
    %p147 = pneg %p146
    // Predicated region
    $region9: #{tpu_custom_call.1} parent=5 // pred_check
      _
    $region10: #{tpu_custom_call.1} parent=5 // pred_check_branch
      %149 = sbr.rel (%p146) target = $region12
    $region11: #{tpu_custom_call.1} parent=5 // pred_region
      %s150 = ssub.s32 %s9, 1
      // Predicated region
      $region13: #{tpu_custom_call.1} parent=11 // pred_check
        %p151 = pneg %p80
      $region14: #{tpu_custom_call.1} parent=11 // pred_check_branch
        %153 = sbr.rel (%p151) target = $region16
      $region15: #{tpu_custom_call.1} parent=11 // pred_region
        %p154 = scmp.lt.s32.totalorder %s21, 0
        %s155 = scalar_select %p154, %s21, 0
        %s156 = smul.addr %s155, 4
        %s157 = scalar_lea.vmem %s1, %s156
      $region16: #{tpu_custom_call.1} parent=11 // pred_fallthru
        _
      // Predicated region
      $region17: #{tpu_custom_call.1} parent=11 // pred_check
        %p158 = pneg %p106
      $region18: #{tpu_custom_call.1} parent=11 // pred_check_branch
        %160 = sbr.rel (%p158) target = $region20
      $region19: #{tpu_custom_call.1} parent=11 // pred_region
        %s161 = smul.u32 32, %s19
        %p162 = scmp.lt.s32.totalorder %s161, 31
        %s163 = scalar_select %p162, %s161, 31
        %s164 = smul.addr %s163, 4
        %s165 = scalar_lea.vmem %s2, %s164
        %s166 = smul.u32 32, %s19
      $region20: #{tpu_custom_call.1} parent=11 // pred_fallthru
        _
    $region12: #{tpu_custom_call.1} parent=5 // pred_fallthru
      _
    %p167 = scmp.lt.s32.totalorder %s9, 2
    // Predicated region
    $region21: #{tpu_custom_call.1} parent=5 // pred_check
      %p168 = pneg %p167
    $region22: #{tpu_custom_call.1} parent=5 // pred_check_branch
      %170 = sbr.rel (%p168) target = $region24
    $region23: #{tpu_custom_call.1} parent=5 // pred_region
      // Predicated region
      $region25: #{tpu_custom_call.1} parent=23 // pred_check
        %p171 = pneg %p48
      $region26: #{tpu_custom_call.1} parent=23 // pred_check_branch
        %173 = sbr.rel (%p171) target = $region28
      $region27: #{tpu_custom_call.1} parent=23 // pred_region
        %p174 = scmp.lt.s32.totalorder %s17, 1
        %s175 = scalar_select %p174, %s17, 1
        %s176 = smul.addr %s175, 8
        %s177 = smul.addr %s176, 8
        %s178 = scalar_lea.vmem %s0, %s177
      $region28: #{tpu_custom_call.1} parent=23 // pred_fallthru
        _
    $region24: #{tpu_custom_call.1} parent=5 // pred_fallthru
      _
    %p179 = scmp.le.s32.totalorder 1, %s9
    %p180 = scmp.lt.s32.totalorder %s9, 3
    %p181 = pnand %p179, %p180
    %p182 = pneg %p181
    // Predicated region
    $region29: #{tpu_custom_call.1} parent=5 // pred_check
      _
    $region30: #{tpu_custom_call.1} parent=5 // pred_check_branch
      %184 = sbr.rel (%p181) target = $region32
    $region31: #{tpu_custom_call.1} parent=5 // pred_region
      %s185 = ssub.s32 %s9, 1
      %p186 = scmp.lt.s32.totalorder %s20, 1
      %s187 = scalar_select %p186, %s20, 1
      %s188 = smul.addr %s187, 8
      %s189 = smul.addr %s188, 8
      %s190 = scalar_lea.vmem %s0, %s189
      %p191 = pneg %p54
      %p192 = pneg %p51
      %p193 = scmp.lt.s32.totalorder %s21, 0
      %s194 = scalar_select %p193, %s21, 0
      %s195 = smul.addr %s194, 4
      %s196 = scalar_lea.vmem %s1, %s195
      %p197 = pneg %p80
      %p198 = pneg %p77
      %s199 = smul.u32 32, %s19
      %p200 = scmp.lt.s32.totalorder %s199, 31
      %s201 = scalar_select %p200, %s199, 31
      %s202 = smul.addr %s201, 4
      %s203 = scalar_lea.vmem %s2, %s202
      %p204 = pneg %p106
      %p205 = pneg %p103
      %p206 = pneg %p136
      %p207 = pneg %p133
      %s208 = smul.u32 32, %s19
      %p209 = scmp.lt.s32.totalorder %s20, 1
      %s210 = scalar_select %p209, %s20, 1
      %p211 = scmp.lt.s32.totalorder %s208, 31
      %s212 = scalar_select %p211, %s208, 31
      %p213 = scmp.lt.s32.totalorder %s21, 0
      %s214 = scalar_select %p213, %s21, 0
      %s215 = sadd.s32 %s214, %s212
      %s216 = smul.addr %s210, 32
      %s217 = sadd.s32 %s215, %s216
      %s218 = smul.addr %s217, 8
      %s219 = scalar_lea.vmem %s3, %s218
      %p220 = scmp.lt.s32.totalorder %s20, 1
      %s221 = scalar_select %p220, %s20, 1
      %s222 = smul.addr %s221, 8
      %s223 = smul.addr %s222, 8
      %s224 = scalar_lea.vmem %s0, %s223
      %p225 = scmp.lt.s32.totalorder %s21, 0
      %s226 = scalar_select %p225, %s21, 0
      %s227 = smul.addr %s226, 4
      %s228 = scalar_lea.vmem %s1, %s227
      %s229 = smul.u32 32, %s19
      %p230 = scmp.lt.s32.totalorder %s229, 31
      %s231 = scalar_select %p230, %s229, 31
      %s232 = smul.addr %s231, 4
      %s233 = scalar_lea.vmem %s2, %s232
      %s234 = smul.u32 32, %s19
      %s235 = smul.u32 32, %s19
      %p236 = scmp.lt.s32.totalorder %s20, 1
      %s237 = scalar_select %p236, %s20, 1
      %p238 = scmp.lt.s32.totalorder %s235, 31
      %s239 = scalar_select %p238, %s235, 31
      %p240 = scmp.lt.s32.totalorder %s21, 0
      %s241 = scalar_select %p240, %s21, 0
      %s242 = sadd.s32 %s241, %s239
      %s243 = smul.addr %s237, 32
      %s244 = sadd.s32 %s242, %s243
      %s245 = smul.addr %s244, 8
      %s246 = scalar_lea.vmem %s3, %s245
      %s247 = smul.u32 32, %s19
      %v249 = vld [vmem:[%s224] sm:$0xff]
      %v250 = vld [vmem:[%s224 + $0x8] sm:$0xff]
      %v251 = vld [vmem:[%s224 + $0x10] sm:$0xff]
      %v252 = vld [vmem:[%s224 + $0x18] sm:$0xff]
      %v253 = vld [vmem:[%s224 + $0x20] sm:$0xff]
      %v254 = vld [vmem:[%s224 + $0x28] sm:$0xff]
      %v255 = vld [vmem:[%s224 + $0x30] sm:$0xff]
      %v256 = vld [vmem:[%s224 + $0x38] sm:$0xff]
      %v257 = vld [vmem:[%s228] sm:$0xf]
      %v258 = vld [vmem:[%s228 + $0x4] sm:$0xf]
      %v261 = vunpack.c.l.b16 %v257
      %v262 = vunpack.c.l.b16 %v258
      %v263 = vpack.c.b16 %v262, %v261
      %vm265 = vcmask 130048
      %v267 = vsel %vm265, %v249, 0
      %v270 = vsel %vm265, %v250, 0
      %v273 = vsel %vm265, %v251, 0
      %v276 = vsel %vm265, %v252, 0
      %v279 = vsel %vm265, %v253, 0
      %v282 = vsel %vm265, %v254, 0
      %v285 = vsel %vm265, %v255, 0
      %v288 = vsel %vm265, %v256, 0
      %290 = vmatpush.bf16.msra.mxu0 0
      %291 = vmatpush.bf16.msra.mxu0 0
      %292 = vmatpush.bf16.msra.mxu0 0
      %293 = vmatpush.bf16.msra.mxu0 0
      %294 = vmatpush.bf16.msra.mxu0 0
      %295 = vmatpush.bf16.msra.mxu0 0
      %296 = vmatpush.bf16.msra.mxu0 0
      %297 = vmatpush.bf16.msra.mxu0 %v263
      %298 = vmatmul.f32.gmra.mxu0 %v267
      %v299 = vpop.f32.mrf.mxu0
      %v300 = vadd.f32 0.0, %v299
      %301 = vmatmul.f32.gmra.mxu0 %v270
      %v302 = vpop.f32.mrf.mxu0
      %v303 = vadd.f32 0.0, %v302
      %304 = vmatmul.f32.gmra.mxu0 %v273
      %v305 = vpop.f32.mrf.mxu0
      %v306 = vadd.f32 0.0, %v305
      %307 = vmatmul.f32.gmra.mxu0 %v276
      %v308 = vpop.f32.mrf.mxu0
      %v309 = vadd.f32 0.0, %v308
      %310 = vmatmul.f32.gmra.mxu0 %v279
      %v311 = vpop.f32.mrf.mxu0
      %v312 = vadd.f32 0.0, %v311
      %313 = vmatmul.f32.gmra.mxu0 %v282
      %v314 = vpop.f32.mrf.mxu0
      %v315 = vadd.f32 0.0, %v314
      %316 = vmatmul.f32.gmra.mxu0 %v285
      %v317 = vpop.f32.mrf.mxu0
      %v318 = vadd.f32 0.0, %v317
      %319 = vmatmul.f32.gmra.mxu0 %v288
      %v320 = vpop.f32.mrf.mxu0
      %v321 = vadd.f32 0.0, %v320
      %322 = vdwg.mxu0
      %v323 = vld [vmem:[%s233] sm:$0xf]
      %v324 = vld [vmem:[%s233 + $0x4] sm:$0xf]
      %v325 = vld [vmem:[%s233 + $0x8] sm:$0xf]
      %v326 = vld [vmem:[%s233 + $0xc] sm:$0xf]
      %v327 = vld [vmem:[%s233 + $0x10] sm:$0xf]
      %v328 = vld [vmem:[%s233 + $0x14] sm:$0xf]
      %v329 = vld [vmem:[%s233 + $0x18] sm:$0xf]
      %v330 = vld [vmem:[%s233 + $0x1c] sm:$0xf]
      %v331 = vld [vmem:[%s233 + $0x20] sm:$0xf]
      %v332 = vld [vmem:[%s233 + $0x24] sm:$0xf]
      %v333 = vld [vmem:[%s233 + $0x28] sm:$0xf]
      %v334 = vld [vmem:[%s233 + $0x2c] sm:$0xf]
      %v335 = vld [vmem:[%s233 + $0x30] sm:$0xf]
      %v336 = vld [vmem:[%s233 + $0x34] sm:$0xf]
      %v337 = vld [vmem:[%s233 + $0x38] sm:$0xf]
      %v338 = vld [vmem:[%s233 + $0x3c] sm:$0xf]
      %v339 = vld [vmem:[%s233 + $0x40] sm:$0xf]
      %v340 = vld [vmem:[%s233 + $0x44] sm:$0xf]
      %v341 = vld [vmem:[%s233 + $0x48] sm:$0xf]
      %v342 = vld [vmem:[%s233 + $0x4c] sm:$0xf]
      %v343 = vld [vmem:[%s233 + $0x50] sm:$0xf]
      %v344 = vld [vmem:[%s233 + $0x54] sm:$0xf]
      %v345 = vld [vmem:[%s233 + $0x58] sm:$0xf]
      %v346 = vld [vmem:[%s233 + $0x5c] sm:$0xf]
      %v347 = vld [vmem:[%s233 + $0x60] sm:$0xf]
      %v348 = vld [vmem:[%s233 + $0x64] sm:$0xf]
      %v349 = vld [vmem:[%s233 + $0x68] sm:$0xf]
      %v350 = vld [vmem:[%s233 + $0x6c] sm:$0xf]
      %v351 = vld [vmem:[%s233 + $0x70] sm:$0xf]
      %v352 = vld [vmem:[%s233 + $0x74] sm:$0xf]
      %v353 = vld [vmem:[%s233 + $0x78] sm:$0xf]
      %v354 = vld [vmem:[%s233 + $0x7c] sm:$0xf]
      %v355 = vpack.c.bf16 %v303, %v300
      %v356 = vpack.c.bf16 %v309, %v306
      %v357 = vpack.c.bf16 %v315, %v312
      %v358 = vpack.c.bf16 %v321, %v318
      %v391 = vunpack.c.l.b16 %v323
      %v392 = vunpack.c.l.b16 %v324
      %v393 = vunpack.c.l.b16 %v325
      %v394 = vunpack.c.l.b16 %v326
      %v395 = vunpack.c.l.b16 %v327
      %v396 = vunpack.c.l.b16 %v328
      %v397 = vunpack.c.l.b16 %v329
      %v398 = vunpack.c.l.b16 %v330
      %v399 = vunpack.c.l.b16 %v331
      %v400 = vunpack.c.l.b16 %v332
      %v401 = vunpack.c.l.b16 %v333
      %v402 = vunpack.c.l.b16 %v334
      %v403 = vunpack.c.l.b16 %v335
      %v404 = vunpack.c.l.b16 %v336
      %v405 = vunpack.c.l.b16 %v337
      %v406 = vunpack.c.l.b16 %v338
      %v407 = vunpack.c.l.b16 %v339
      %v408 = vunpack.c.l.b16 %v340
      %v409 = vunpack.c.l.b16 %v341
      %v410 = vunpack.c.l.b16 %v342
      %v411 = vunpack.c.l.b16 %v343
      %v412 = vunpack.c.l.b16 %v344
      %v413 = vunpack.c.l.b16 %v345
      %v414 = vunpack.c.l.b16 %v346
      %v415 = vunpack.c.l.b16 %v347
      %v416 = vunpack.c.l.b16 %v348
      %v417 = vunpack.c.l.b16 %v349
      %v418 = vunpack.c.l.b16 %v350
      %v419 = vunpack.c.l.b16 %v351
      %v420 = vunpack.c.l.b16 %v352
      %v421 = vunpack.c.l.b16 %v353
      %v422 = vunpack.c.l.b16 %v354
      %v423 = vpack.c.b16 %v392, %v391
      %v424 = vpack.c.b16 %v394, %v393
      %v425 = vpack.c.b16 %v396, %v395
      %v426 = vpack.c.b16 %v398, %v397
      %v427 = vpack.c.b16 %v400, %v399
      %v428 = vpack.c.b16 %v402, %v401
      %v429 = vpack.c.b16 %v404, %v403
      %v430 = vpack.c.b16 %v406, %v405
      %v431 = vpack.c.b16 %v408, %v407
      %v432 = vpack.c.b16 %v410, %v409
      %v433 = vpack.c.b16 %v412, %v411
      %v434 = vpack.c.b16 %v414, %v413
      %v435 = vpack.c.b16 %v416, %v415
      %v436 = vpack.c.b16 %v418, %v417
      %v437 = vpack.c.b16 %v420, %v419
      %v438 = vpack.c.b16 %v422, %v421
      %vm439 = vcmask 523264
      %v441 = vsel %vm439, %v423, 0
      %v444 = vsel %vm439, %v424, 0
      %v447 = vsel %vm439, %v425, 0
      %v450 = vsel %vm439, %v426, 0
      %v453 = vsel %vm439, %v427, 0
      %v456 = vsel %vm439, %v428, 0
      %v459 = vsel %vm439, %v429, 0
      %v462 = vsel %vm439, %v430, 0
      %v465 = vsel %vm439, %v431, 0
      %v468 = vsel %vm439, %v432, 0
      %v471 = vsel %vm439, %v433, 0
      %v474 = vsel %vm439, %v434, 0
      %v477 = vsel %vm439, %v435, 0
      %v480 = vsel %vm439, %v436, 0
      %v483 = vsel %vm439, %v437, 0
      %v486 = vsel %vm439, %v438, 0
      %488 = vmatpush.bf16.msra.mxu0 0
      %489 = vmatpush.bf16.msra.mxu0 0
      %490 = vmatpush.bf16.msra.mxu0 0
      %491 = vmatpush.bf16.msra.mxu0 0
      %492 = vmatpush.bf16.msra.mxu0 %v358
      %493 = vmatpush.bf16.msra.mxu0 %v357
      %494 = vmatpush.bf16.msra.mxu0 %v356
      %495 = vmatpush.bf16.msra.mxu0 %v355
      %496 = vmatmul.bf16.gmra.mxu0 %v441
      %v497 = vpop.f32.mrf.mxu0
      %v498 = vadd.f32 0.0, %v497
      %v499 = vpop.f32.mrf.mxu0
      %v500 = vadd.f32 0.0, %v499
      %501 = vmatmul.bf16.gmra.mxu0 %v444
      %v502 = vpop.f32.mrf.mxu0
      %v503 = vadd.f32 0.0, %v502
      %v504 = vpop.f32.mrf.mxu0
      %v505 = vadd.f32 0.0, %v504
      %506 = vmatmul.bf16.gmra.mxu0 %v447
      %v507 = vpop.f32.mrf.mxu0
      %v508 = vadd.f32 0.0, %v507
      %v509 = vpop.f32.mrf.mxu0
      %v510 = vadd.f32 0.0, %v509
      %511 = vmatmul.bf16.gmra.mxu0 %v450
      %v512 = vpop.f32.mrf.mxu0
      %v513 = vadd.f32 0.0, %v512
      %v514 = vpop.f32.mrf.mxu0
      %v515 = vadd.f32 0.0, %v514
      %516 = vmatmul.bf16.gmra.mxu0 %v453
      %v517 = vpop.f32.mrf.mxu0
      %v518 = vadd.f32 0.0, %v517
      %v519 = vpop.f32.mrf.mxu0
      %v520 = vadd.f32 0.0, %v519
      %521 = vmatmul.bf16.gmra.mxu0 %v456
      %v522 = vpop.f32.mrf.mxu0
      %v523 = vadd.f32 0.0, %v522
      %v524 = vpop.f32.mrf.mxu0
      %v525 = vadd.f32 0.0, %v524
      %526 = vmatmul.bf16.gmra.mxu0 %v459
      %v527 = vpop.f32.mrf.mxu0
      %v528 = vadd.f32 0.0, %v527
      %v529 = vpop.f32.mrf.mxu0
      %v530 = vadd.f32 0.0, %v529
      %531 = vmatmul.bf16.gmra.mxu0 %v462
      %v532 = vpop.f32.mrf.mxu0
      %v533 = vadd.f32 0.0, %v532
      %v534 = vpop.f32.mrf.mxu0
      %v535 = vadd.f32 0.0, %v534
      %536 = vmatmul.bf16.gmra.mxu0 %v465
      %v537 = vpop.f32.mrf.mxu0
      %v538 = vadd.f32 0.0, %v537
      %v539 = vpop.f32.mrf.mxu0
      %v540 = vadd.f32 0.0, %v539
      %541 = vmatmul.bf16.gmra.mxu0 %v468
      %v542 = vpop.f32.mrf.mxu0
      %v543 = vadd.f32 0.0, %v542
      %v544 = vpop.f32.mrf.mxu0
      %v545 = vadd.f32 0.0, %v544
      %546 = vmatmul.bf16.gmra.mxu0 %v471
      %v547 = vpop.f32.mrf.mxu0
      %v548 = vadd.f32 0.0, %v547
      %v549 = vpop.f32.mrf.mxu0
      %v550 = vadd.f32 0.0, %v549
      %551 = vmatmul.bf16.gmra.mxu0 %v474
      %v552 = vpop.f32.mrf.mxu0
      %v553 = vadd.f32 0.0, %v552
      %v554 = vpop.f32.mrf.mxu0
      %v555 = vadd.f32 0.0, %v554
      %556 = vmatmul.bf16.gmra.mxu0 %v477
      %v557 = vpop.f32.mrf.mxu0
      %v558 = vadd.f32 0.0, %v557
      %v559 = vpop.f32.mrf.mxu0
      %v560 = vadd.f32 0.0, %v559
      %561 = vmatmul.bf16.gmra.mxu0 %v480
      %v562 = vpop.f32.mrf.mxu0
      %v563 = vadd.f32 0.0, %v562
      %v564 = vpop.f32.mrf.mxu0
      %v565 = vadd.f32 0.0, %v564
      %566 = vmatmul.bf16.gmra.mxu0 %v483
      %v567 = vpop.f32.mrf.mxu0
      %v568 = vadd.f32 0.0, %v567
      %v569 = vpop.f32.mrf.mxu0
      %v570 = vadd.f32 0.0, %v569
      %571 = vmatmul.bf16.gmra.mxu0 %v486
      %v572 = vpop.f32.mrf.mxu0
      %v573 = vadd.f32 0.0, %v572
      %v574 = vpop.f32.mrf.mxu0
      %v575 = vadd.f32 0.0, %v574
      %576 = vdwg.mxu0
      %vm577 = vcmask 261120
      %578 = vst.msk [vmem:[%s246] sm:$0xff] %vm577, %v498
      %579 = vst.msk [vmem:[%s246 + $0x8] sm:$0xff] %vm577, %v500
      %580 = vst.msk [vmem:[%s246 + $0x10] sm:$0xff] %vm577, %v503
      %581 = vst.msk [vmem:[%s246 + $0x18] sm:$0xff] %vm577, %v505
      %582 = vst.msk [vmem:[%s246 + $0x20] sm:$0xff] %vm577, %v508
      %583 = vst.msk [vmem:[%s246 + $0x28] sm:$0xff] %vm577, %v510
      %584 = vst.msk [vmem:[%s246 + $0x30] sm:$0xff] %vm577, %v513
      %585 = vst.msk [vmem:[%s246 + $0x38] sm:$0xff] %vm577, %v515
      %586 = vst.msk [vmem:[%s246 + $0x40] sm:$0xff] %vm577, %v518
      %587 = vst.msk [vmem:[%s246 + $0x48] sm:$0xff] %vm577, %v520
      %588 = vst.msk [vmem:[%s246 + $0x50] sm:$0xff] %vm577, %v523
      %589 = vst.msk [vmem:[%s246 + $0x58] sm:$0xff] %vm577, %v525
      %590 = vst.msk [vmem:[%s246 + $0x60] sm:$0xff] %vm577, %v528
      %591 = vst.msk [vmem:[%s246 + $0x68] sm:$0xff] %vm577, %v530
      %592 = vst.msk [vmem:[%s246 + $0x70] sm:$0xff] %vm577, %v533
      %593 = vst.msk [vmem:[%s246 + $0x78] sm:$0xff] %vm577, %v535
      %594 = vst.msk [vmem:[%s246 + $0x80] sm:$0xff] %vm577, %v538
      %595 = vst.msk [vmem:[%s246 + $0x88] sm:$0xff] %vm577, %v540
      %596 = vst.msk [vmem:[%s246 + $0x90] sm:$0xff] %vm577, %v543
      %597 = vst.msk [vmem:[%s246 + $0x98] sm:$0xff] %vm577, %v545
      %598 = vst.msk [vmem:[%s246 + $0xa0] sm:$0xff] %vm577, %v548
      %599 = vst.msk [vmem:[%s246 + $0xa8] sm:$0xff] %vm577, %v550
      %600 = vst.msk [vmem:[%s246 + $0xb0] sm:$0xff] %vm577, %v553
      %601 = vst.msk [vmem:[%s246 + $0xb8] sm:$0xff] %vm577, %v555
      %602 = vst.msk [vmem:[%s246 + $0xc0] sm:$0xff] %vm577, %v558
      %603 = vst.msk [vmem:[%s246 + $0xc8] sm:$0xff] %vm577, %v560
      %604 = vst.msk [vmem:[%s246 + $0xd0] sm:$0xff] %vm577, %v563
      %605 = vst.msk [vmem:[%s246 + $0xd8] sm:$0xff] %vm577, %v565
      %606 = vst.msk [vmem:[%s246 + $0xe0] sm:$0xff] %vm577, %v568
      %607 = vst.msk [vmem:[%s246 + $0xe8] sm:$0xff] %vm577, %v570
      %608 = vst.msk [vmem:[%s246 + $0xf0] sm:$0xff] %vm577, %v573
      %609 = vst.msk [vmem:[%s246 + $0xf8] sm:$0xff] %vm577, %v575
      %s610 = smul.u32 32, %s19
      %p611 = scmp.lt.s32.totalorder %s20, 1
      %s612 = scalar_select %p611, %s20, 1
      %p613 = scmp.lt.s32.totalorder %s610, 31
      %s614 = scalar_select %p613, %s610, 31
      %p615 = scmp.lt.s32.totalorder %s21, 0
      %s616 = scalar_select %p615, %s21, 0
      %s617 = sadd.s32 %s616, %s614
      %s618 = smul.addr %s612, 32
      %s619 = sadd.s32 %s617, %s618
      %s620 = smul.addr %s619, 8
      %s621 = scalar_lea.vmem %s3, %s620
      // Predicated region
      $region33: #{tpu_custom_call.1} parent=31 // pred_check
        %p622 = pneg %p133
      $region34: #{tpu_custom_call.1} parent=31 // pred_check_branch
        %624 = sbr.rel (%p622) target = $region36
      $region35: #{tpu_custom_call.1} parent=31 // pred_region
        %s625 = smul.u32 32, %s19
      $region36: #{tpu_custom_call.1} parent=31 // pred_fallthru
        _
    $region32: #{tpu_custom_call.1} parent=5 // pred_fallthru
      _
    %p626 = scmp.le.s32.totalorder 2, %s9
    // Predicated region
    $region37: #{tpu_custom_call.1} parent=5 // pred_check
      %p627 = pneg %p626
    $region38: #{tpu_custom_call.1} parent=5 // pred_check_branch
      %629 = sbr.rel (%p627) target = $region40
    $region39: #{tpu_custom_call.1} parent=5 // pred_region
      %s630 = ssub.s32 %s9, 2
      // Predicated region
      $region41: #{tpu_custom_call.1} parent=39 // pred_check
        %p631 = pneg %p139
      $region42: #{tpu_custom_call.1} parent=39 // pred_check_branch
        %633 = sbr.rel (%p631) target = $region44
      $region43: #{tpu_custom_call.1} parent=39 // pred_region
        %s634 = smul.u32 32, %s22
        %p635 = scmp.lt.s32.totalorder %s23, 1
        %s636 = scalar_select %p635, %s23, 1
        %p637 = scmp.lt.s32.totalorder %s634, 31
        %s638 = scalar_select %p637, %s634, 31
        %p639 = scmp.lt.s32.totalorder %s24, 0
        %s640 = scalar_select %p639, %s24, 0
        %s641 = sadd.s32 %s640, %s638
        %s642 = smul.addr %s636, 32
        %s643 = sadd.s32 %s641, %s642
        %s644 = smul.addr %s643, 8
        %s645 = scalar_lea.vmem %s3, %s644
      $region44: #{tpu_custom_call.1} parent=39 // pred_fallthru
        _
    $region40: #{tpu_custom_call.1} parent=5 // pred_fallthru
      _
  $region6: #{tpu_custom_call.1} parent=0 // loop_footer
    %s13 = sadd.s32 1, %s9
  $region7: #{tpu_custom_call.1} parent=0 // loop_footer_branch
    %8 = sbr.rel target = $region3
  $region8: #{tpu_custom_call.1} parent=0 // loop_exit
    _

</llo_original>
